<compile_context>
chip_gen: v5e
topology: v5e:2x2
jax: 0.10.0
libtpu: 0.0.40
codegen_flags: <defaults>
</compile_context>

<pallas_src>
import functools

import jax
import jax.numpy as jnp
from jax.experimental import pallas as pl
from jax.experimental.pallas import tpu as pltpu


def _round_up(x, n):
    return (x + n - 1) // n * n


# -----------------------------------------------------------------------------
# One-time capability probes (run eagerly, outside jit, cached).
# -----------------------------------------------------------------------------
_PIPELINE_MODE_SUPPORTED = None


def _pipeline_mode_supported():
    """True iff pl.BlockSpec(..., pipeline_mode=pl.Buffered(1)) lowers cleanly."""
    global _PIPELINE_MODE_SUPPORTED
    if _PIPELINE_MODE_SUPPORTED is not None:
        return _PIPELINE_MODE_SUPPORTED

    def _copy(x_ref, o_ref):
        o_ref[...] = x_ref[...]

    try:
        spec = pl.BlockSpec((8, 128), lambda i: (0, 0),
                            pipeline_mode=pl.Buffered(1))
        fn = pl.pallas_call(
            _copy,
            out_shape=jax.ShapeDtypeStruct((8, 128), jnp.float32),
            grid=(1,),
            in_specs=[spec],
            out_specs=pl.BlockSpec((8, 128), lambda i: (0, 0)),
        )
        jax.block_until_ready(fn(jnp.zeros((8, 128), jnp.float32)))
        _PIPELINE_MODE_SUPPORTED = True
    except Exception:
        _PIPELINE_MODE_SUPPORTED = False
    return _PIPELINE_MODE_SUPPORTED


def _vmem_capacity_bytes():
    """Physical VMEM per core; conservative (v7x, 64 MiB) fallback if unknown."""
    try:
        cap = int(pltpu.get_tpu_info().vmem_capacity_bytes)
        if cap > 0:
            return cap
    except Exception:
        pass
    return 64 << 20


# -----------------------------------------------------------------------------
# Kernel
# -----------------------------------------------------------------------------
def _gated_mlp_kernel(x_ref, w12_ref, b12_ref, w3_ref, b3_ref, o_ref, acc_ref):
    """One (token-block, hidden-block) step of the fused gated MLP.

    x_ref  : (tm, d_in)           activations (input dtype)
    w12_ref: (1, d_in, 2*th)      fused [W1^T | W2^T] hidden slice, MXU dtype
    b12_ref: (1, 1, 2*th)         fused [b1 | b2] slice, f32
    w3_ref : (1, th, d_out_pad)   W3^T hidden slice, MXU dtype
    b3_ref : (1, d_out_pad)       b3, f32
    o_ref  : (tm, d_out_pad)      output block (written on last hidden step)
    acc_ref: (tm, d_out_pad) f32  output-projection accumulator (scratch)
    """
    k = pl.program_id(1)

    @pl.when(k == 0)
    def _init():
        acc_ref[...] = jnp.zeros_like(acc_ref)

    w12 = w12_ref[0]                     # (d_in, 2*th)
    w3 = w3_ref[0]                       # (th, d_out_pad)
    th = w3.shape[0]

    # Fused hidden + gate projection: one MXU pass, native-dtype operands,
    # f32 accumulation.
    x = x_ref[...].astype(w12.dtype)
    hg = jnp.dot(x, w12, preferred_element_type=jnp.float32) + b12_ref[0]

    # Static lane-aligned split (th is a multiple of 128).
    h = hg[:, :th]
    g = hg[:, th:]

    # silu(h) * g in f32:  silu(h) = h * sigmoid(h) = h / (1 + exp(-h)).
    act = (h * g) / (1.0 + jnp.exp(-h))

    # Output projection for this hidden slice; accumulate in f32.
    acc_ref[...] += jnp.dot(act.astype(w3.dtype), w3,
                            preferred_element_type=jnp.float32)

    @pl.when(k == pl.num_programs(1) - 1)
    def _finalize():
        o_ref[...] = (acc_ref[...] + b3_ref[...]).astype(o_ref.dtype)


# -----------------------------------------------------------------------------
# Tiling heuristics
# -----------------------------------------------------------------------------
def _largest_div8(n, upper):
    """Largest multiple of 8 that divides n and is <= upper (or None)."""
    best = None
    d = 8
    upper = min(upper, n)
    while d <= upper:
        if n % d == 0:
            best = d
        d += 8
    return best


def _select_tiles(m, d_in, hidden, d_out, x_bytes, mxu_bytes, out_bytes,
                  budget, block_m, block_h, single_buffer_ok):
    """Pick (tm, nb, hidden_pad, d_out_pad, vmem_need_estimate)."""
    m8 = _round_up(max(m, 1), 8)
    d_out_pad = _round_up(d_out, 128) if d_out < 128 else d_out

    # Hidden (reduction) blocking.
    if block_h is not None:
        th = max(128, _round_up(int(block_h), 128))
        hidden_pad = _round_up(max(hidden, 1), th)
        nb = hidden_pad // th
    else:
        nb = 1
        hidden_pad = _round_up(max(hidden, 1), 128)
        th = hidden_pad

    # Token blocking.
    if block_m is not None:
        tm = max(8, _round_up(min(int(block_m), m8), 8))
    else:
        tm = max(8, min(512, m8))

    def vmem_need(tm_, nb_, th_):
        single = single_buffer_ok and nb_ == 1
        wbuf = 1 if single else 2
        weights = wbuf * ((d_in * 2 * th_ + th_ * d_out_pad) * mxu_bytes
                          + (2 * th_ + d_out_pad) * 4)
        io = 2 * tm_ * d_in * x_bytes + 2 * tm_ * d_out_pad * out_bytes
        acc = tm_ * d_out_pad * 4
        temps = tm_ * 2 * th_ * 4 + tm_ * th_ * 4 + tm_ * d_in * mxu_bytes
        return weights + io + acc + temps

    # Shrink until it fits: prefer hidden-tiling (keeps tm large), then tm.
    while vmem_need(tm, nb, th) > budget:
        if block_h is None and th > 128:
            nb *= 2
            hidden_pad = _round_up(max(hidden, 1), nb * 128)
            th = hidden_pad // nb
        elif tm > 8:
            tm = max(8, _round_up(tm // 2, 8))
        else:
            break

    if block_m is None:
        # Prefer a tm that divides the 8-aligned row count (no pad copies).
        div = _largest_div8(m8, tm)
        if div is not None and div * 4 >= tm:
            tm = div
        # At least two grid steps so both v7x TensorCores get work.
        if m8 // tm < 2 and m8 >= 16:
            half = _largest_div8(m8, m8 // 2)
            tm = half if half is not None else max(8, _round_up(m8 // 2, 8))

    return tm, nb, hidden_pad, d_out_pad, vmem_need(tm, nb, th)


# -----------------------------------------------------------------------------
# Jitted implementation + public wrapper
# -----------------------------------------------------------------------------
@functools.partial(
    jax.jit,
    static_argnames=("tm", "nb", "hidden_pad", "d_out_pad", "use_bf16",
                     "single_buffer_weights", "vmem_limit"))
def _gated_mlp_impl(x2d, w1, b1, w2, b2, w3, b3, *, tm, nb, hidden_pad,
                    d_out_pad, use_bf16, single_buffer_weights, vmem_limit):
    m, d_in = x2d.shape
    hidden = w1.shape[0]
    d_out = w3.shape[0]
    th = hidden_pad // nb

    mxu_dtype = jnp.bfloat16 if use_bf16 else w1.dtype

    # --- operand packing ------------------------------------------------------
    # TODO(synk): for repeated inference, pre-pack / pre-cast the weights once
    #             outside this call instead of re-deriving them every forward.
    ph = hidden_pad - hidden
    w1t = jnp.pad(w1.T, ((0, 0), (0, ph)))                 # (d_in, hidden_pad)
    w2t = jnp.pad(w2.T, ((0, 0), (0, ph)))
    b1p = jnp.pad(b1, (0, ph)).astype(jnp.float32)
    b2p = jnp.pad(b2, (0, ph)).astype(jnp.float32)

    w1b = w1t.reshape(d_in, nb, th).transpose(1, 0, 2)      # (nb, d_in, th)
    w2b = w2t.reshape(d_in, nb, th).transpose(1, 0, 2)
    w12 = jnp.concatenate([w1b, w2b], axis=-1).astype(mxu_dtype)   # (nb,d_in,2th)
    b12 = jnp.concatenate([b1p.reshape(nb, 1, th),
                           b2p.reshape(nb, 1, th)], axis=-1)       # (nb,1,2th)

    w3p = jnp.pad(w3.T, ((0, ph), (0, d_out_pad - d_out)))  # (hidden_pad, d_out_pad)
    w3b = w3p.reshape(nb, th, d_out_pad).astype(mxu_dtype)
    b3p = jnp.pad(b3, (0, d_out_pad - d_out)).reshape(1, d_out_pad)
    b3p = b3p.astype(jnp.float32)

    # TODO(synk): masked ragged last block (scalar-prefetched row count) would
    #             remove this small residual pad entirely.
    m_pad = _round_up(m, tm)
    if m_pad != m:
        x2d = jnp.pad(x2d, ((0, m_pad - m), (0, 0)))

    grid = (m_pad // tm, nb)
    w_invariant = nb == 1   # hidden-sliced operands are grid-invariant iff nb == 1

    def _wspec(block_shape, index_map, invariant):
        if invariant and single_buffer_weights:
            return pl.BlockSpec(block_shape, index_map,
                                pipeline_mode=pl.Buffered(1))
        return pl.BlockSpec(block_shape, index_map)

    flops = 2 * m * (d_in * 2 * hidden_pad + hidden_pad * d_out_pad) \
        + 4 * m * hidden_pad
    bytes_accessed = (m_pad * d_in * x2d.dtype.itemsize
                      + m_pad * d_out_pad * x2d.dtype.itemsize
                      + (d_in * 2 * hidden_pad + hidden_pad * d_out_pad)
                      * jnp.dtype(mxu_dtype).itemsize)
    cost = pl.CostEstimate(flops=int(flops),
                           transcendentals=int(m * hidden_pad),
                           bytes_accessed=int(bytes_accessed))

    out2d = pl.pallas_call(
        _gated_mlp_kernel,
        out_shape=jax.ShapeDtypeStruct((m_pad, d_out_pad), x2d.dtype),
        grid_spec=pltpu.PrefetchScalarGridSpec(
            num_scalar_prefetch=0,
            grid=grid,
            in_specs=[
                pl.BlockSpec((tm, d_in), lambda i, k: (i, 0)),            # x
                _wspec((1, d_in, 2 * th), lambda i, k: (k, 0, 0), w_invariant),
                _wspec((1, 1, 2 * th), lambda i, k: (k, 0, 0), w_invariant),
                _wspec((1, th, d_out_pad), lambda i, k: (k, 0, 0), w_invariant),
                _wspec((1, d_out_pad), lambda i, k: (0, 0), True),        # b3
            ],
            out_specs=pl.BlockSpec((tm, d_out_pad), lambda i, k: (i, 0)),
            scratch_shapes=[pltpu.VMEM((tm, d_out_pad), jnp.float32)],
        ),
        compiler_params=pltpu.CompilerParams(
            dimension_semantics=("parallel", "arbitrary"),
            vmem_limit_bytes=int(vmem_limit)),
        cost_estimate=cost,
    )(x2d, w12, b12, w3b, b3p)

    return out2d[:m, :d_out]


def gated_mlp(x, w1, b1, w2, b2, w3, b3, *, block_m=None, block_h=None,
              use_bf16_matmul=True):
    """Fused gated-MLP forward.

    x  : (..., d_in)
    w1 : (hidden, d_in)   b1 : (hidden,)    -- nn.Linear "hidden"
    w2 : (hidden, d_in)   b2 : (hidden,)    -- nn.Linear "gate"
    w3 : (d_out, hidden)  b3 : (d_out,)     -- nn.Linear "output"
    returns (..., d_out)
    """
    orig_shape = x.shape
    d_in = orig_shape[-1]
    hidden = w1.shape[0]
    d_out = w3.shape[0]

    x2d = x.reshape(-1, d_in)
    m = x2d.shape[0]

    use_bf16 = bool(use_bf16_matmul) and w1.dtype == jnp.float32
    mxu_bytes = 2 if use_bf16 else jnp.dtype(w1.dtype).itemsize

    single_buffer_ok = _pipeline_mode_supported()
    vmem_cap = _vmem_capacity_bytes()
    budget = (vmem_cap * 3) // 4          # ~48 MiB on v7x, ~96 MiB on v5e/v6e

    tm, nb, hidden_pad, d_out_pad, need = _select_tiles(
        m, d_in, hidden, d_out,
        x_bytes=jnp.dtype(x.dtype).itemsize,
        mxu_bytes=mxu_bytes,
        out_bytes=jnp.dtype(x.dtype).itemsize,
        budget=budget,
        block_m=block_m, block_h=block_h,
        single_buffer_ok=single_buffer_ok)

    vmem_limit = int(min(max(need + need // 4 + (4 << 20), 32 << 20),
                         vmem_cap - (8 << 20)))

    out2d = _gated_mlp_impl(
        x2d, w1, b1, w2, b2, w3, b3,
        tm=int(tm), nb=int(nb), hidden_pad=int(hidden_pad),
        d_out_pad=int(d_out_pad), use_bf16=bool(use_bf16),
        single_buffer_weights=bool(single_buffer_ok),
        vmem_limit=vmem_limit)

    return out2d.reshape(*orig_shape[:-1], d_out)


# -----------------------------------------------------------------------------
# References
# -----------------------------------------------------------------------------
def _reference_f32(x, w1, b1, w2, b2, w3, b3):
    h = jax.nn.silu(x @ w1.T + b1)
    g = x @ w2.T + b2
    return (h * g) @ w3.T + b3


def _reference_bf16(x, w1, b1, w2, b2, w3, b3):
    """Mirror of the kernel's default numerics: bf16 MXU operands, f32 accum."""
    bf, f32 = jnp.bfloat16, jnp.float32
    xb = x.astype(bf)
    h = jnp.dot(xb, w1.T.astype(bf), preferred_element_type=f32) + b1
    g = jnp.dot(xb, w2.T.astype(bf), preferred_element_type=f32) + b2
    act = ((h * g) / (1.0 + jnp.exp(-h))).astype(bf)
    return jnp.dot(act, w3.T.astype(bf), preferred_element_type=f32) + b3


if __name__ == "__main__":
    # Module defaults: input_dim=32 -> hidden_dim = 4*32 = 128 (already a
    # multiple of `multiple_of`=8), output_dim = input_dim, bias=True, silu.
    batch, seq, input_dim = 2, 8, 32
    hidden_dim = 4 * input_dim
    output_dim = input_dim

    key = jax.random.PRNGKey(0)
    keys = jax.random.split(key, 12)

    x = jax.random.normal(keys[0], (batch, seq, input_dim), dtype=jnp.float32)

    def linear_params(kw, kb, out_dim, in_dim):
        s = 1.0 / jnp.sqrt(in_dim)
        w = jax.random.uniform(kw, (out_dim, in_dim), minval=-s, maxval=s)
        b = jax.random.uniform(kb, (out_dim,), minval=-s, maxval=s)
        return w, b

    w1, b1 = linear_params(keys[1], keys[2], hidden_dim, input_dim)
    w2, b2 = linear_params(keys[3], keys[4], hidden_dim, input_dim)
    w3, b3 = linear_params(keys[5], keys[6], output_dim, hidden_dim)

    # 1) Default fast path (bf16 MXU, f32 accumulation), multi-block token grid.
    out = jax.block_until_ready(gated_mlp(x, w1, b1, w2, b2, w3, b3))
    ref = _reference_bf16(x, w1, b1, w2, b2, w3, b3)
    assert out.shape == (batch, seq, output_dim)
    assert jnp.allclose(out, ref, atol=5e-3, rtol=5e-3), "mismatch (bf16 path)"

    # 2) Ragged token count (21 rows -> padded to 24) with an explicit block.
    x2 = jax.random.normal(keys[7], (3, 7, input_dim), dtype=jnp.float32)
    out2 = jax.block_until_ready(
        gated_mlp(x2, w1, b1, w2, b2, w3, b3, block_m=8))
    ref2 = _reference_bf16(x2, w1, b1, w2, b2, w3, b3)
    assert out2.shape == (3, 7, output_dim)
    assert jnp.allclose(out2, ref2, atol=5e-3, rtol=5e-3), "mismatch (ragged path)"

    # 3) Hidden-tiled accumulator path (hidden=256 split into two 128 blocks).
    hidden2 = 256
    w1b, b1b = linear_params(keys[8], keys[9], hidden2, input_dim)
    w2b, b2b = linear_params(keys[10], keys[11], hidden2, input_dim)
    w3b, b3b = linear_params(keys[5], keys[6], output_dim, hidden2)
    out3 = jax.block_until_ready(
        gated_mlp(x, w1b, b1b, w2b, b2b, w3b, b3b, block_h=128))
    ref3 = _reference_bf16(x, w1b, b1b, w2b, b2b, w3b, b3b)
    assert out3.shape == (batch, seq, output_dim)
    assert jnp.allclose(out3, ref3, atol=5e-3, rtol=5e-3), "mismatch (H-tiled path)"

    # 4) All-f32 operand path (MXU default precision), loose tolerance.
    out4 = jax.block_until_ready(
        gated_mlp(x, w1, b1, w2, b2, w3, b3, use_bf16_matmul=False))
    ref4 = _reference_f32(x, w1, b1, w2, b2, w3, b3)
    assert jnp.allclose(out4, ref4, atol=3e-2, rtol=3e-2), "mismatch (f32 path)"

    print("KERNEL_OK")
</pallas_src>

<mosaic_0001>
module attributes {stable_mosaic.version = 11 : i64} {
  func.func @_copy(%arg0: i32, %arg1: memref<8x128xf32, #tpu.memory_space<vmem>>, %arg2: memref<8x128xf32, #tpu.memory_space<vmem>>) attributes {dimension_semantics = [#tpu.dimension_semantics<arbitrary>], iteration_bounds = array<i64: 1>, scalar_prefetch = 0 : i64, scratch_operands = 0 : i64, tpu.core_type = #tpu.core_type<tc>, window_params = [{pipeline_mode = #tpu.pipeline_mode<synchronous>, transform_indices = @transform_0, window_bounds = array<i64: 8, 128>}, {pipeline_mode = #tpu.pipeline_mode<synchronous>, transform_indices = @transform_1, window_bounds = array<i64: 8, 128>}]} {
    %c0 = arith.constant 0 : index
    %c0_0 = arith.constant 0 : index
    %0 = vector.load %arg1[%c0, %c0_0] : memref<8x128xf32, #tpu.memory_space<vmem>>, vector<8x128xf32>
    %c0_1 = arith.constant 0 : index
    %c0_2 = arith.constant 0 : index
    %1 = vector.load %arg2[%c0_1, %c0_2] : memref<8x128xf32, #tpu.memory_space<vmem>>, vector<8x128xf32>
    tpu.vector_store %arg2[%c0_1, %c0_2], %0 {strides = array<i32>} : memref<8x128xf32, #tpu.memory_space<vmem>>, vector<8x128xf32>,
    return
  }
  func.func @transform_0(%arg0: i32) -> (i32, i32) {
    %c0_i32 = arith.constant 0 : i32
    %c0_i32_0 = arith.constant 0 : i32
    %c0_i32_1 = arith.constant 0 : i32
    return %c0_i32, %c0_i32_0 : i32, i32
  }
  func.func @transform_1(%arg0: i32) -> (i32, i32) {
    %c0_i32 = arith.constant 0 : i32
    %c0_i32_0 = arith.constant 0 : i32
    %c0_i32_1 = arith.constant 0 : i32
    return %c0_i32, %c0_i32_0 : i32, i32
  }
}

module attributes {stable_mosaic.version = 11 : i64} {
  func.func @_gated_mlp_kernel(%arg0: i32, %arg1: i32, %arg2: memref<8x32xf32, #tpu.memory_space<vmem>>, %arg3: memref<1x32x256xbf16, #tpu.memory_space<vmem>>, %arg4: memref<1x1x256xf32, #tpu.memory_space<vmem>>, %arg5: memref<1x128x128xbf16, #tpu.memory_space<vmem>>, %arg6: memref<1x128xf32, #tpu.memory_space<vmem>>, %arg7: memref<8x128xf32, #tpu.memory_space<vmem>>, %arg8: memref<8x128xf32, #tpu.memory_space<vmem>>) attributes {dimension_semantics = [#tpu.dimension_semantics<parallel>, #tpu.dimension_semantics<arbitrary>], iteration_bounds = array<i64: 2, 1>, scalar_prefetch = 0 : i64, scratch_operands = 1 : i64, tpu.core_type = #tpu.core_type<tc>, window_params = [{transform_indices = @transform_0, window_bounds = array<i64: 8, 32>}, {transform_indices = @transform_1, window_bounds = array<i64: 1, 32, 256>}, {transform_indices = @transform_2, window_bounds = array<i64: 1, 1, 256>}, {transform_indices = @transform_3, window_bounds = array<i64: 1, 128, 128>}, {pipeline_mode = #tpu.pipeline_mode<synchronous>, transform_indices = @transform_4, window_bounds = array<i64: 1, 128>}, {transform_indices = @transform_5, window_bounds = array<i64: 8, 128>}]} {
    %c0_i32 = arith.constant 0 : i32
    %0 = arith.cmpi eq, %arg1, %c0_i32 : i32
    %1 = arith.extui %0 : i1 to i32
    %c0_i32_0 = arith.constant 0 : i32
    %2 = arith.cmpi ne, %1, %c0_i32_0 : i32
    scf.if %2 {
      %cst_20 = arith.constant 0.000000e+00 : f32
      %31 = vector.broadcast %cst_20 : f32 to vector<8x128xf32>
      %c0_21 = arith.constant 0 : index
      %c0_22 = arith.constant 0 : index
      %32 = vector.load %arg8[%c0_21, %c0_22] : memref<8x128xf32, #tpu.memory_space<vmem>>, vector<8x128xf32>
      tpu.vector_store %arg8[%c0_21, %c0_22], %31 {strides = array<i32>} : memref<8x128xf32, #tpu.memory_space<vmem>>, vector<8x128xf32>,
    } else {
    }
    %c0 = arith.constant 0 : index
    %c0_1 = arith.constant 0 : index
    %c0_2 = arith.constant 0 : index
    %3 = vector.load %arg3[%c0, %c0_1, %c0_2] : memref<1x32x256xbf16, #tpu.memory_space<vmem>>, vector<1x32x256xbf16>
    %4 = vector.shape_cast %3 : vector<1x32x256xbf16> to vector<32x256xbf16>
    %c0_3 = arith.constant 0 : index
    %c0_4 = arith.constant 0 : index
    %c0_5 = arith.constant 0 : index
    %5 = vector.load %arg5[%c0_3, %c0_4, %c0_5] : memref<1x128x128xbf16, #tpu.memory_space<vmem>>, vector<1x128x128xbf16>
    %6 = vector.shape_cast %5 : vector<1x128x128xbf16> to vector<128x128xbf16>
    %c0_6 = arith.constant 0 : index
    %c0_7 = arith.constant 0 : index
    %7 = vector.load %arg2[%c0_6, %c0_7] : memref<8x32xf32, #tpu.memory_space<vmem>>, vector<8x32xf32>
    %8 = arith.truncf %7 : vector<8x32xf32> to vector<8x32xbf16>
    %cst = arith.constant dense<0.000000e+00> : vector<8x256xf32>
    %9 = tpu.matmul %8, %4, %cst {dimension_numbers = #tpu.dot_dimension_numbers<[1], [0], [0], [1], [0, 0, 1, 1], [], []>} : vector<8x32xbf16>, vector<32x256xbf16>, vector<8x256xf32> -> vector<8x256xf32>
    %c0_8 = arith.constant 0 : index
    %c0_9 = arith.constant 0 : index
    %c0_10 = arith.constant 0 : index
    %10 = vector.load %arg4[%c0_8, %c0_9, %c0_10] : memref<1x1x256xf32, #tpu.memory_space<vmem>>, vector<1x1x256xf32>
    %11 = vector.shape_cast %10 : vector<1x1x256xf32> to vector<1x256xf32>
    %12 = vector.broadcast %11 : vector<1x256xf32> to vector<8x256xf32>
    %13 = arith.addf %9, %12 : vector<8x256xf32>
    %14 = vector.extract_strided_slice %13 {offsets = [0, 0], sizes = [8, 128], strides = [1, 1]} : vector<8x256xf32> to vector<8x128xf32>
    %15 = vector.extract_strided_slice %13 {offsets = [0, 128], sizes = [8, 128], strides = [1, 1]} : vector<8x256xf32> to vector<8x128xf32>
    %16 = arith.mulf %14, %15 : vector<8x128xf32>
    %cst_11 = arith.constant 0.000000e+00 : f32
    %17 = vector.broadcast %cst_11 : f32 to vector<8x128xf32>
    %18 = arith.subf %17, %14 : vector<8x128xf32>
    %19 = math.exp %18 : vector<8x128xf32>
    %cst_12 = arith.constant 1.000000e+00 : f32
    %20 = vector.broadcast %cst_12 : f32 to vector<8x128xf32>
    %21 = arith.addf %20, %19 : vector<8x128xf32>
    %22 = arith.divf %16, %21 : vector<8x128xf32>
    %c0_13 = arith.constant 0 : index
    %c0_14 = arith.constant 0 : index
    %23 = vector.load %arg8[%c0_13, %c0_14] : memref<8x128xf32, #tpu.memory_space<vmem>>, vector<8x128xf32>
    %24 = arith.truncf %22 : vector<8x128xf32> to vector<8x128xbf16>
    %cst_15 = arith.constant dense<0.000000e+00> : vector<8x128xf32>
    %25 = tpu.matmul %24, %6, %cst_15 {dimension_numbers = #tpu.dot_dimension_numbers<[1], [0], [0], [1], [0, 0, 1, 1], [], []>} : vector<8x128xbf16>, vector<128x128xbf16>, vector<8x128xf32> -> vector<8x128xf32>
    %26 = arith.addf %23, %25 : vector<8x128xf32>
    %c0_16 = arith.constant 0 : index
    %c0_17 = arith.constant 0 : index
    %27 = vector.load %arg8[%c0_16, %c0_17] : memref<8x128xf32, #tpu.memory_space<vmem>>, vector<8x128xf32>
    tpu.vector_store %arg8[%c0_16, %c0_17], %26 {strides = array<i32>} : memref<8x128xf32, #tpu.memory_space<vmem>>, vector<8x128xf32>,
    %c0_i32_18 = arith.constant 0 : i32
    %28 = arith.cmpi eq, %arg1, %c0_i32_18 : i32
    %29 = arith.extui %28 : i1 to i32
    %c0_i32_19 = arith.constant 0 : i32
    %30 = arith.cmpi ne, %29, %c0_i32_19 : i32
    scf.if %30 {
      %c0_20 = arith.constant 0 : index
      %c0_21 = arith.constant 0 : index
      %31 = vector.load %arg8[%c0_20, %c0_21] : memref<8x128xf32, #tpu.memory_space<vmem>>, vector<8x128xf32>
      %c0_22 = arith.constant 0 : index
      %c0_23 = arith.constant 0 : index
      %32 = vector.load %arg6[%c0_22, %c0_23] : memref<1x128xf32, #tpu.memory_space<vmem>>, vector<1x128xf32>
      %33 = vector.broadcast %32 : vector<1x128xf32> to vector<8x128xf32>
      %34 = arith.addf %31, %33 : vector<8x128xf32>
      %c0_24 = arith.constant 0 : index
      %c0_25 = arith.constant 0 : index
      %35 = vector.load %arg7[%c0_24, %c0_25] : memref<8x128xf32, #tpu.memory_space<vmem>>, vector<8x128xf32>
      tpu.vector_store %arg7[%c0_24, %c0_25], %34 {strides = array<i32>} : memref<8x128xf32, #tpu.memory_space<vmem>>, vector<8x128xf32>,
    } else {
    }
    return
  }
  func.func @transform_0(%arg0: i32, %arg1: i32) -> (i32, i32) {
    %c0_i32 = arith.constant 0 : i32
    %c0_i32_0 = arith.constant 0 : i32
    return %arg0, %c0_i32 : i32, i32
  }
  func.func @transform_1(%arg0: i32, %arg1: i32) -> (i32, i32, i32) {
    %c0_i32 = arith.constant 0 : i32
    %c0_i32_0 = arith.constant 0 : i32
    %c0_i32_1 = arith.constant 0 : i32
    return %arg1, %c0_i32, %c0_i32_0 : i32, i32, i32
  }
  func.func @transform_2(%arg0: i32, %arg1: i32) -> (i32, i32, i32) {
    %c0_i32 = arith.constant 0 : i32
    %c0_i32_0 = arith.constant 0 : i32
    %c0_i32_1 = arith.constant 0 : i32
    return %arg1, %c0_i32, %c0_i32_0 : i32, i32, i32
  }
  func.func @transform_3(%arg0: i32, %arg1: i32) -> (i32, i32, i32) {
    %c0_i32 = arith.constant 0 : i32
    %c0_i32_0 = arith.constant 0 : i32
    %c0_i32_1 = arith.constant 0 : i32
    return %arg1, %c0_i32, %c0_i32_0 : i32, i32, i32
  }
  func.func @transform_4(%arg0: i32, %arg1: i32) -> (i32, i32) {
    %c0_i32 = arith.constant 0 : i32
    %c0_i32_0 = arith.constant 0 : i32
    %c0_i32_1 = arith.constant 0 : i32
    return %c0_i32, %c0_i32_0 : i32, i32
  }
  func.func @transform_5(%arg0: i32, %arg1: i32) -> (i32, i32) {
    %c0_i32 = arith.constant 0 : i32
    %c0_i32_0 = arith.constant 0 : i32
    return %arg0, %c0_i32 : i32, i32
  }
}

</mosaic_0001>

<llo_original>
// kernel: tpu_custom_call.1
$region0: #{tpu_custom_call.1}
  #allocation0 [shape = 'u32[]', space=smem, size = 0x4, offset = 0x4, fixed_abs, tag = 'smem constant byte address 0x4 - core index']
  #allocation1 [shape = 'u32[72,128]{1,0:T(1,128)}', space=vmem, size = 0x9000, scoped, tag = 'internal scratch']
  %s0 = inlined_call_operand.hbm [shape: f32[8,128], index: 0, kind: input, shape index: {}]
  %s1 = inlined_call_operand.hbm [shape: f32[8,128], index: 1, kind: output, shape index: {}]
  %s2 = sld [smem:[#allocation0]]
  $region18: #{tpu_custom_call.1} parent=0
    _
  %s4 = ssub.s32 1, %s2
  %s5 = scalar_select 0, %s4, %s2
  $region1: #{tpu_custom_call.1} parent=0
    #allocation2 [shape = 'u8[4096]{0}', space=vmem, size = 0x1000, scoped, tag = 'input window, operand 0, single buffered']
    #allocation3 [shape = 's32[1]{0}', space=sflag, size = 0x4, scoped, tag = 'scoped memory for tpu_custom_call.1']
    #allocation4 [shape = 's32[1]{0}', space=sflag, size = 0x4, scoped, tag = 'scoped memory for tpu_custom_call.1']
    #allocation5 [shape = 'u8[4096]{0}', space=vmem, size = 0x1000, scoped, tag = 'output window, operand 0, single buffered']
    %6 = vsyncpa [#allocation3], 0
    %7 = vsyncpa [#allocation4], 0
    // Predicated region
    $region2: #{tpu_custom_call.1} parent=1 // pred_check
      _
    $region3: #{tpu_custom_call.1} parent=1 // pred_check_branch
      %9 = sbr.rel (0) target = $region5
    $region4: #{tpu_custom_call.1} parent=1 // pred_region
      %11 = vsyncadd [#allocation3], 0
      %s13 = sshll.u32 %s0, 4
      %s14 = int_to_ptr.hbm [resolvable:$true] %s13
      %s15 = sshll.u32 [#allocation2], 4
      %s16 = int_to_ptr.vmem [resolvable:$true] %s15
      %18 = dma.hbm_to_vmem [thread:$0]  %s14, 128, %s16, [#allocation3]
    $region5: #{tpu_custom_call.1} parent=1 // pred_fallthru
      _
    // Predicated region
    $region6: #{tpu_custom_call.1} parent=1 // pred_check
      _
    $region7: #{tpu_custom_call.1} parent=1 // pred_check_branch
      %20 = sbr.rel (0) target = $region9
    $region8: #{tpu_custom_call.1} parent=1 // pred_region
      %22 = dma.done [#allocation3], 128
    $region9: #{tpu_custom_call.1} parent=1 // pred_fallthru
      _
    %v23 = vld [vmem:[#allocation2] sm:$0xff]
    %24 = vst [vmem:[#allocation5] sm:$0xff] %v23
    // Predicated region
    $region10: #{tpu_custom_call.1} parent=1 // pred_check
      _
    $region11: #{tpu_custom_call.1} parent=1 // pred_check_branch
      %26 = sbr.rel (0) target = $region13
    $region12: #{tpu_custom_call.1} parent=1 // pred_region
      %28 = vsyncadd [#allocation4], 0
      %s30 = sshll.u32 [#allocation5], 4
      %s31 = int_to_ptr.vmem [resolvable:$true] %s30
      %s32 = sshll.u32 %s1, 4
      %s33 = int_to_ptr.hbm [resolvable:$true] %s32
      %35 = dma.vmem_to_hbm [thread:$0]  %s31, 128, %s33, [#allocation4]
    $region13: #{tpu_custom_call.1} parent=1 // pred_fallthru
      _
    // Predicated region
    $region14: #{tpu_custom_call.1} parent=1 // pred_check
      _
    $region15: #{tpu_custom_call.1} parent=1 // pred_check_branch
      %37 = sbr.rel (0) target = $region17
    $region16: #{tpu_custom_call.1} parent=1 // pred_region
      %39 = dma.done [#allocation4], 128
    $region17: #{tpu_custom_call.1} parent=1 // pred_fallthru
      _
    %40 = vsyncpa [#allocation3], 1
    %41 = vsyncpa [#allocation4], 1

// kernel: _gated_mlp_impl.1
$region0: #{_gated_mlp_impl.1}
  #allocation0 [shape = 'u32[]', space=smem, size = 0x4, offset = 0x4, fixed_abs, tag = 'smem constant byte address 0x4 - core index']
  #allocation1 [shape = 'u32[72,128]{1,0:T(1,128)}', space=vmem, size = 0x9000, scoped, tag = 'internal scratch']
  #allocation2 [shape = 'f32[8,128]{1,0:T(8,128)}', space=vmem, size = 0x1000, scoped, tag = 'scratch operand']
  %s0 = inlined_call_operand.vmem [shape: f32[16,32], index: 0, kind: input, shape index: {}]
  %s1 = inlined_call_operand.vmem [shape: bf16[1,32,256], index: 1, kind: input, shape index: {}]
  %s2 = inlined_call_operand.vmem [shape: f32[1,1,256], index: 2, kind: input, shape index: {}]
  %s3 = inlined_call_operand.vmem [shape: bf16[1,128,128], index: 3, kind: input, shape index: {}]
  %s4 = inlined_call_operand.vmem [shape: f32[1,128], index: 4, kind: input, shape index: {}]
  %s5 = inlined_call_operand.hbm [shape: f32[16,128], index: 5, kind: output, shape index: {}]
  %s6 = sld [smem:[#allocation0]]
  $region61: #{_gated_mlp_impl.1} parent=0
    _
  %s8 = ssub.s32 1, %s6
  %s9 = scalar_select 0, %s8, %s6
  $region1: #{_gated_mlp_impl.1} parent=0
    #allocation3 [shape = 'u8[8192]{0}', space=vmem, size = 0x2000, scoped, tag = 'output window, operand 0']
    #allocation4 [shape = 's32[2]{0}', space=sflag, size = 0x8, scoped, tag = 'scoped memory for _gated_mlp_impl.1']
    %10 = vsyncpa [#allocation4], 0
    %s11 = scalar_lea.sflag [#allocation4], 1
    %12 = vsyncpa %s11, 0
    loop: start=0, step=1, limit=4
    $region2: #{_gated_mlp_impl.1} parent=1 // loop_pre_header
      _
    $region3: #{_gated_mlp_impl.1} parent=1 // loop_header
      %s14 = sphi 0, %s18
      %p15 = scmp.ge.s32.totalorder %s14, 4
      %s21 = sphi 0, %s33
      %s22 = sphi 0, %s29
      %s23 = sphi 0, %s21
      %s24 = sphi 0, %s22
      %s25 = sphi 0, %s23
      %s26 = sphi 0, %s24
      %s36 = sphi 0, %s38
      %s39 = sphi 0, %s36
      %s40 = sphi 0, %s39
      %s56 = sphi 0, %s40
      %s62 = sphi 0, %s64
      %s65 = sphi 0, %s62
      %s66 = sphi 0, %s65
      %s82 = sphi 0, %s66
      %s88 = sphi 0, %s90
      %s91 = sphi 0, %s88
      %s92 = sphi 0, %s91
      %s108 = sphi 0, %s92
      %s114 = sphi 0, %s116
      %s117 = sphi 0, %s114
      %s118 = sphi 0, %s117
      %s134 = sphi 0, %s118
      %s138 = sphi 0, %s138
      %s140 = sphi 0, %s138
      %s141 = sphi 0, %s140
      %s155 = sphi 0, %s141
      %s161 = sphi 0, %s163
      %s164 = sphi 0, %s161
      %s165 = sphi 0, %s164
      %s181 = sphi 0, %s165
    $region4: #{_gated_mlp_impl.1} parent=1 // loop_header_branch
      %17 = sbr.rel (%p15) target = $region8
    $region5: #{_gated_mlp_impl.1} parent=1 // loop_body
      %s19 = ssub.s32 %s14, 1
      %s20 = ssub.s32 %s14, 2
      %s27 = sadd.s32 1, %s22
      %p28 = scmp.ge.s32.totalorder %s27, 1
      %s29 = scalar_select %p28, 0, %s27
      %s30 = sadd.s32 1, %s21
      %s31 = scalar_select %p28, %s30, %s21
      %p32 = scmp.ge.s32.totalorder %s31, 2
      %s33 = scalar_select %p32, 0, %s31
      %s34 = ssub.s32 %s21, %s33
      %p35 = scmp.eq.s32.totalorder %s34, 0
      %s37 = sadd.s32 %s36, 1
      %s38 = scalar_select %p35, %s36, %s37
      %p41 = pneg %p35
      %p42 = scmp.eq.s32.totalorder %s14, 1
      %p43 = por %p41, %p42
      %p44 = scmp.ne.s32.totalorder %s36, %s39
      %p45 = scmp.eq.s32.totalorder %s14, 0
      %p46 = por %p44, %p45
      %p47 = scmp.ne.s32.totalorder %s36, %s39
      %p48 = scmp.eq.s32.totalorder %s19, 1
      %p49 = por %p47, %p48
      %p50 = scmp.ne.s32.totalorder %s39, %s40
      %p51 = scmp.eq.s32.totalorder %s19, 0
      %p52 = por %p50, %p51
      %p53 = scmp.ne.s32.totalorder %s39, %s40
      %p54 = scmp.eq.s32.totalorder %s20, 1
      %p55 = por %p53, %p54
      %p57 = scmp.ne.s32.totalorder %s40, %s56
      %p58 = scmp.eq.s32.totalorder %s20, 0
      %p59 = por %p57, %p58
      %s60 = ssub.s32 %s22, %s29
      %p61 = scmp.eq.s32.totalorder %s60, 0
      %s63 = sadd.s32 %s62, 1
      %s64 = scalar_select %p61, %s62, %s63
      %p67 = pneg %p61
      %p68 = scmp.eq.s32.totalorder %s14, 1
      %p69 = por %p67, %p68
      %p70 = scmp.ne.s32.totalorder %s62, %s65
      %p71 = scmp.eq.s32.totalorder %s14, 0
      %p72 = por %p70, %p71
      %p73 = scmp.ne.s32.totalorder %s62, %s65
      %p74 = scmp.eq.s32.totalorder %s19, 1
      %p75 = por %p73, %p74
      %p76 = scmp.ne.s32.totalorder %s65, %s66
      %p77 = scmp.eq.s32.totalorder %s19, 0
      %p78 = por %p76, %p77
      %p79 = scmp.ne.s32.totalorder %s65, %s66
      %p80 = scmp.eq.s32.totalorder %s20, 1
      %p81 = por %p79, %p80
      %p83 = scmp.ne.s32.totalorder %s66, %s82
      %p84 = scmp.eq.s32.totalorder %s20, 0
      %p85 = por %p83, %p84
      %s86 = ssub.s32 %s22, %s29
      %p87 = scmp.eq.s32.totalorder %s86, 0
      %s89 = sadd.s32 %s88, 1
      %s90 = scalar_select %p87, %s88, %s89
      %p93 = pneg %p87
      %p94 = scmp.eq.s32.totalorder %s14, 1
      %p95 = por %p93, %p94
      %p96 = scmp.ne.s32.totalorder %s88, %s91
      %p97 = scmp.eq.s32.totalorder %s14, 0
      %p98 = por %p96, %p97
      %p99 = scmp.ne.s32.totalorder %s88, %s91
      %p100 = scmp.eq.s32.totalorder %s19, 1
      %p101 = por %p99, %p100
      %p102 = scmp.ne.s32.totalorder %s91, %s92
      %p103 = scmp.eq.s32.totalorder %s19, 0
      %p104 = por %p102, %p103
      %p105 = scmp.ne.s32.totalorder %s91, %s92
      %p106 = scmp.eq.s32.totalorder %s20, 1
      %p107 = por %p105, %p106
      %p109 = scmp.ne.s32.totalorder %s92, %s108
      %p110 = scmp.eq.s32.totalorder %s20, 0
      %p111 = por %p109, %p110
      %s112 = ssub.s32 %s22, %s29
      %p113 = scmp.eq.s32.totalorder %s112, 0
      %s115 = sadd.s32 %s114, 1
      %s116 = scalar_select %p113, %s114, %s115
      %p119 = pneg %p113
      %p120 = scmp.eq.s32.totalorder %s14, 1
      %p121 = por %p119, %p120
      %p122 = scmp.ne.s32.totalorder %s114, %s117
      %p123 = scmp.eq.s32.totalorder %s14, 0
      %p124 = por %p122, %p123
      %p125 = scmp.ne.s32.totalorder %s114, %s117
      %p126 = scmp.eq.s32.totalorder %s19, 1
      %p127 = por %p125, %p126
      %p128 = scmp.ne.s32.totalorder %s117, %s118
      %p129 = scmp.eq.s32.totalorder %s19, 0
      %p130 = por %p128, %p129
      %p131 = scmp.ne.s32.totalorder %s117, %s118
      %p132 = scmp.eq.s32.totalorder %s20, 1
      %p133 = por %p131, %p132
      %p135 = scmp.ne.s32.totalorder %s118, %s134
      %p136 = scmp.eq.s32.totalorder %s20, 0
      %p137 = por %p135, %p136
      %s139 = sadd.s32 %s138, 1
      %p142 = scmp.eq.s32.totalorder %s14, 1
      %p143 = scmp.ne.s32.totalorder %s138, %s140
      %p144 = scmp.eq.s32.totalorder %s14, 0
      %p145 = por %p143, %p144
      %p146 = scmp.ne.s32.totalorder %s138, %s140
      %p147 = scmp.eq.s32.totalorder %s19, 1
      %p148 = por %p146, %p147
      %p149 = scmp.ne.s32.totalorder %s140, %s141
      %p150 = scmp.eq.s32.totalorder %s19, 0
      %p151 = por %p149, %p150
      %p152 = scmp.ne.s32.totalorder %s140, %s141
      %p153 = scmp.eq.s32.totalorder %s20, 1
      %p154 = por %p152, %p153
      %p156 = scmp.ne.s32.totalorder %s141, %s155
      %p157 = scmp.eq.s32.totalorder %s20, 0
      %p158 = por %p156, %p157
      %s159 = ssub.s32 %s21, %s33
      %p160 = scmp.eq.s32.totalorder %s159, 0
      %s162 = sadd.s32 %s161, 1
      %s163 = scalar_select %p160, %s161, %s162
      %p166 = pneg %p160
      %p167 = scmp.eq.s32.totalorder %s14, 1
      %p168 = por %p166, %p167
      %p169 = scmp.ne.s32.totalorder %s161, %s164
      %p170 = scmp.eq.s32.totalorder %s14, 0
      %p171 = por %p169, %p170
      %p172 = scmp.ne.s32.totalorder %s161, %s164
      %p173 = scmp.eq.s32.totalorder %s19, 1
      %p174 = por %p172, %p173
      %p175 = scmp.ne.s32.totalorder %s164, %s165
      %p176 = scmp.eq.s32.totalorder %s19, 0
      %p177 = por %p175, %p176
      %p178 = scmp.ne.s32.totalorder %s164, %s165
      %p179 = scmp.eq.s32.totalorder %s20, 1
      %p180 = por %p178, %p179
      %p182 = scmp.ne.s32.totalorder %s165, %s181
      %p183 = scmp.eq.s32.totalorder %s20, 0
      %p184 = por %p182, %p183
      %p185 = scmp.le.s32.totalorder 1, %s14
      %p186 = scmp.lt.s32.totalorder %s14, 3
      %p187 = pnand %p185, %p186
      %p188 = pneg %p187
      // Predicated region
      $region9: #{_gated_mlp_impl.1} parent=5 // pred_check
        _
      $region10: #{_gated_mlp_impl.1} parent=5 // pred_check_branch
        %190 = sbr.rel (%p187) target = $region12
      $region11: #{_gated_mlp_impl.1} parent=5 // pred_region
        %s191 = ssub.s32 %s14, 1
        // Predicated region
        $region13: #{_gated_mlp_impl.1} parent=11 // pred_check
          %p192 = pneg %p78
        $region14: #{_gated_mlp_impl.1} parent=11 // pred_check_branch
          %194 = sbr.rel (%p192) target = $region16
        $region15: #{_gated_mlp_impl.1} parent=11 // pred_region
          %p195 = scmp.lt.s32.totalorder %s24, 0
          %s196 = scalar_select %p195, %s24, 0
          %s197 = smul.addr %s196, 8
          %s198 = smul.addr %s197, 4
          %s199 = scalar_lea.vmem %s1, %s198
        $region16: #{_gated_mlp_impl.1} parent=11 // pred_fallthru
          _
        // Predicated region
        $region17: #{_gated_mlp_impl.1} parent=11 // pred_check
          %p200 = pneg %p104
        $region18: #{_gated_mlp_impl.1} parent=11 // pred_check_branch
          %202 = sbr.rel (%p200) target = $region20
        $region19: #{_gated_mlp_impl.1} parent=11 // pred_region
          %p203 = scmp.lt.s32.totalorder %s24, 0
          %s204 = scalar_select %p203, %s24, 0
          %s205 = smul.addr %s204, 2
          %s206 = scalar_lea.vmem %s2, %s205
        $region20: #{_gated_mlp_impl.1} parent=11 // pred_fallthru
          _
        // Predicated region
        $region21: #{_gated_mlp_impl.1} parent=11 // pred_check
          %p207 = pneg %p130
        $region22: #{_gated_mlp_impl.1} parent=11 // pred_check_branch
          %209 = sbr.rel (%p207) target = $region24
        $region23: #{_gated_mlp_impl.1} parent=11 // pred_region
          %p210 = scmp.lt.s32.totalorder %s24, 0
          %s211 = scalar_select %p210, %s24, 0
          %s212 = smul.addr %s211, 16
          %s213 = smul.addr %s212, 4
          %s214 = scalar_lea.vmem %s3, %s213
        $region24: #{_gated_mlp_impl.1} parent=11 // pred_fallthru
          _
        // Predicated region
        $region25: #{_gated_mlp_impl.1} parent=11 // pred_check
          %p215 = pneg %p151
        $region26: #{_gated_mlp_impl.1} parent=11 // pred_check_branch
          %217 = sbr.rel (%p215) target = $region28
        $region27: #{_gated_mlp_impl.1} parent=11 // pred_region
          _
        $region28: #{_gated_mlp_impl.1} parent=11 // pred_fallthru
          _
      $region12: #{_gated_mlp_impl.1} parent=5 // pred_fallthru
        _
      %p218 = scmp.lt.s32.totalorder %s14, 2
      // Predicated region
      $region29: #{_gated_mlp_impl.1} parent=5 // pred_check
        %p219 = pneg %p218
      $region30: #{_gated_mlp_impl.1} parent=5 // pred_check_branch
        %221 = sbr.rel (%p219) target = $region32
      $region31: #{_gated_mlp_impl.1} parent=5 // pred_region
        // Predicated region
        $region33: #{_gated_mlp_impl.1} parent=31 // pred_check
          %p222 = pneg %p46
        $region34: #{_gated_mlp_impl.1} parent=31 // pred_check_branch
          %224 = sbr.rel (%p222) target = $region36
        $region35: #{_gated_mlp_impl.1} parent=31 // pred_region
          %p225 = scmp.lt.s32.totalorder %s21, 1
          %s226 = scalar_select %p225, %s21, 1
          %s227 = smul.addr %s226, 8
          %s228 = scalar_lea.vmem %s0, %s227
        $region36: #{_gated_mlp_impl.1} parent=31 // pred_fallthru
          _
      $region32: #{_gated_mlp_impl.1} parent=5 // pred_fallthru
        _
      %p229 = scmp.le.s32.totalorder 1, %s14
      %p230 = scmp.lt.s32.totalorder %s14, 3
      %p231 = pnand %p229, %p230
      %p232 = pneg %p231
      // Predicated region
      $region37: #{_gated_mlp_impl.1} parent=5 // pred_check
        _
      $region38: #{_gated_mlp_impl.1} parent=5 // pred_check_branch
        %234 = sbr.rel (%p231) target = $region40
      $region39: #{_gated_mlp_impl.1} parent=5 // pred_region
        %s235 = ssub.s32 %s14, 1
        %p236 = scmp.lt.s32.totalorder %s23, 1
        %s237 = scalar_select %p236, %s23, 1
        %s238 = smul.addr %s237, 8
        %s239 = scalar_lea.vmem %s0, %s238
        %p240 = pneg %p52
        %p241 = pneg %p49
        %p242 = scmp.lt.s32.totalorder %s24, 0
        %s243 = scalar_select %p242, %s24, 0
        %s244 = smul.addr %s243, 8
        %s245 = smul.addr %s244, 4
        %s246 = scalar_lea.vmem %s1, %s245
        %p247 = pneg %p78
        %p248 = pneg %p75
        %p249 = scmp.lt.s32.totalorder %s24, 0
        %s250 = scalar_select %p249, %s24, 0
        %s251 = smul.addr %s250, 2
        %s252 = scalar_lea.vmem %s2, %s251
        %p253 = pneg %p104
        %p254 = pneg %p101
        %p255 = scmp.lt.s32.totalorder %s24, 0
        %s256 = scalar_select %p255, %s24, 0
        %s257 = smul.addr %s256, 16
        %s258 = smul.addr %s257, 4
        %s259 = scalar_lea.vmem %s3, %s258
        %p260 = pneg %p130
        %p261 = pneg %p127
        %p262 = pneg %p151
        %p263 = pneg %p148
        %p264 = pneg %p177
        %p265 = pneg %p174
        %s266 = sand.u32 %s164, 1
        %s267 = scalar_lea.sflag [#allocation4], %s266
        %s268 = sand.u32 %s164, 1
        %s269 = smul.addr %s268, 8
        %s270 = scalar_lea.vmem [#allocation3], %s269
        %p271 = scmp.lt.s32.totalorder %s23, 1
        %s272 = scalar_select %p271, %s23, 1
        %s273 = smul.addr %s272, 8
        %s274 = scalar_lea.vmem %s0, %s273
        %p275 = scmp.lt.s32.totalorder %s24, 0
        %s276 = scalar_select %p275, %s24, 0
        %s277 = smul.addr %s276, 8
        %s278 = smul.addr %s277, 4
        %s279 = scalar_lea.vmem %s1, %s278
        %p280 = scmp.lt.s32.totalorder %s24, 0
        %s281 = scalar_select %p280, %s24, 0
        %s282 = smul.addr %s281, 2
        %s283 = scalar_lea.vmem %s2, %s282
        %p284 = scmp.lt.s32.totalorder %s24, 0
        %s285 = scalar_select %p284, %s24, 0
        %s286 = smul.addr %s285, 16
        %s287 = smul.addr %s286, 4
        %s288 = scalar_lea.vmem %s3, %s287
        %p290 = scmp.eq.s32.totalorder %s24, 0
        // Predicated region
        $region41: #{_gated_mlp_impl.1} parent=39 // pred_check
          %p291 = pneg %p290
        $region42: #{_gated_mlp_impl.1} parent=39 // pred_check_branch
          %293 = sbr.rel (%p291) target = $region44
        $region43: #{_gated_mlp_impl.1} parent=39 // pred_region
          %294 = vst [vmem:[#allocation2] sm:$0xff] 0.0
        $region44: #{_gated_mlp_impl.1} parent=39 // pred_fallthru
          _
        %v295 = vld [vmem:[%s279] sm:$0xff]
        %v296 = vld [vmem:[%s279 + $0x8] sm:$0xff]
        %v297 = vld [vmem:[%s279 + $0x10] sm:$0xff]
        %v298 = vld [vmem:[%s279 + $0x18] sm:$0xff]
        %v299 = vld [vmem:[%s288] sm:$0xf]
        %v300 = vld [vmem:[%s288 + $0x4] sm:$0xf]
        %v301 = vld [vmem:[%s288 + $0x8] sm:$0xf]
        %v302 = vld [vmem:[%s288 + $0xc] sm:$0xf]
        %v303 = vld [vmem:[%s288 + $0x10] sm:$0xf]
        %v304 = vld [vmem:[%s288 + $0x14] sm:$0xf]
        %v305 = vld [vmem:[%s288 + $0x18] sm:$0xf]
        %v306 = vld [vmem:[%s288 + $0x1c] sm:$0xf]
        %v307 = vld [vmem:[%s288 + $0x20] sm:$0xf]
        %v308 = vld [vmem:[%s288 + $0x24] sm:$0xf]
        %v309 = vld [vmem:[%s288 + $0x28] sm:$0xf]
        %v310 = vld [vmem:[%s288 + $0x2c] sm:$0xf]
        %v311 = vld [vmem:[%s288 + $0x30] sm:$0xf]
        %v312 = vld [vmem:[%s288 + $0x34] sm:$0xf]
        %v313 = vld [vmem:[%s288 + $0x38] sm:$0xf]
        %v314 = vld [vmem:[%s288 + $0x3c] sm:$0xf]
        %v315 = vld [vmem:[%s274] sm:$0xff]
        %v316 = vpack.c.bf16 %v315, %v315
        %v317 = vld [vmem:[%s283] sm:$0x3]
        %v319 = vperm.slane %v317, 0
        %v320 = vperm.slane %v317, 1
        %v327 = vunpack.c.l.b16 %v295
        %v328 = vunpack.c.h.b16 %v295
        %v329 = vunpack.c.l.b16 %v296
        %v330 = vunpack.c.h.b16 %v296
        %v331 = vunpack.c.l.b16 %v297
        %v332 = vunpack.c.h.b16 %v297
        %v333 = vunpack.c.l.b16 %v298
        %v334 = vunpack.c.h.b16 %v298
        %v335 = vpack.c.b16 %v329, %v327
        %v336 = vpack.c.b16 %v330, %v328
        %v337 = vpack.c.b16 %v333, %v331
        %v338 = vpack.c.b16 %v334, %v332
        %vm343 = vcmask 261120
        %v345 = vsel %vm343, %v316, 0
        %347 = vmatpush.bf16.msra.mxu0 0
        %348 = vmatpush.bf16.msra.mxu0 0
        %349 = vmatpush.bf16.msra.mxu0 0
        %350 = vmatpush.bf16.msra.mxu0 0
        %351 = vmatpush.bf16.msra.mxu0 0
        %352 = vmatpush.bf16.msra.mxu0 0
        %353 = vmatpush.bf16.msra.mxu0 %v337
        %354 = vmatpush.bf16.msra.mxu0 %v335
        %355 = vmatmul.bf16.gmra.mxu0 %v345
        %v356 = vpop.f32.mrf.mxu0
        %v357 = vadd.f32 %v319, %v356
        %v358 = vpop.f32.mrf.mxu0
        %359 = vdwg.mxu0
        %360 = vmatpush.bf16.msra.mxu0 0
        %361 = vmatpush.bf16.msra.mxu0 0
        %362 = vmatpush.bf16.msra.mxu0 0
        %363 = vmatpush.bf16.msra.mxu0 0
        %364 = vmatpush.bf16.msra.mxu0 0
        %365 = vmatpush.bf16.msra.mxu0 0
        %366 = vmatpush.bf16.msra.mxu0 %v338
        %367 = vmatpush.bf16.msra.mxu0 %v336
        %368 = vmatmul.bf16.gmra.mxu0 %v345
        %v369 = vpop.f32.mrf.mxu0
        %v370 = vadd.f32 %v320, %v369
        %v371 = vpop.f32.mrf.mxu0
        %372 = vdwg.mxu0
        %v373 = vmul.f32 %v357, %v370
        %v374 = vsub.f32 0.0, %v357
        %v375 = vmul.f32 %v374, 1.442695
        %v376 = vpow.pop %v375
        %v377 = vadd.f32 %v376, 1.0
        %v378 = vrcp.pop %v377
        %v379 = vmul.f32 %v377, %v378
        %v380 = vsub.f32 1.0, %v379
        %v381 = vmul.f32 %v378, %v380
        %v382 = vadd.f32 %v378, %v381
        %vm383 = vweird.f32 %v377
        %vm384 = vweird.f32 %v378
        %vm385 = vmor %vm383, %vm384
        %v386 = vsel %vm385, %v378, %v382
        %v387 = vand.u32 2147483647, %v377
        %vm388 = vcmp.eq.f32.partialorder %v387, 8.507059e+37
        %v389 = vand.u32 %v377, 2147483648
        %v390 = vor.u32 1.1754944e-38, %v389
        %v391 = vsel %vm388, %v390, %v386
        %v392 = vmul.f32 %v373, %v391
        %v393 = vld [vmem:[#allocation2] sm:$0xff]
        %v394 = vpack.c.bf16 %v392, %v392
        %v411 = vunpack.c.l.b16 %v299
        %v412 = vunpack.c.l.b16 %v300
        %v413 = vunpack.c.l.b16 %v301
        %v414 = vunpack.c.l.b16 %v302
        %v415 = vunpack.c.l.b16 %v303
        %v416 = vunpack.c.l.b16 %v304
        %v417 = vunpack.c.l.b16 %v305
        %v418 = vunpack.c.l.b16 %v306
        %v419 = vunpack.c.l.b16 %v307
        %v420 = vunpack.c.l.b16 %v308
        %v421 = vunpack.c.l.b16 %v309
        %v422 = vunpack.c.l.b16 %v310
        %v423 = vunpack.c.l.b16 %v311
        %v424 = vunpack.c.l.b16 %v312
        %v425 = vunpack.c.l.b16 %v313
        %v426 = vunpack.c.l.b16 %v314
        %v427 = vpack.c.b16 %v412, %v411
        %v428 = vpack.c.b16 %v414, %v413
        %v429 = vpack.c.b16 %v416, %v415
        %v430 = vpack.c.b16 %v418, %v417
        %v431 = vpack.c.b16 %v420, %v419
        %v432 = vpack.c.b16 %v422, %v421
        %v433 = vpack.c.b16 %v424, %v423
        %v434 = vpack.c.b16 %v426, %v425
        %443 = vmatpush.bf16.msra.mxu0 %v434
        %444 = vmatpush.bf16.msra.mxu0 %v433
        %445 = vmatpush.bf16.msra.mxu0 %v432
        %446 = vmatpush.bf16.msra.mxu0 %v431
        %447 = vmatpush.bf16.msra.mxu0 %v430
        %448 = vmatpush.bf16.msra.mxu0 %v429
        %449 = vmatpush.bf16.msra.mxu0 %v428
        %450 = vmatpush.bf16.msra.mxu0 %v427
        %451 = vmatmul.bf16.gmra.mxu0 %v394
        %v452 = vpop.f32.mrf.mxu0
        %v453 = vadd.f32 0.0, %v452
        %v454 = vpop.f32.mrf.mxu0
        %455 = vdwg.mxu0
        %v456 = vadd.f32 %v393, %v453
        %457 = vst [vmem:[#allocation2] sm:$0xff] %v456
        // Predicated region
        $region45: #{_gated_mlp_impl.1} parent=39 // pred_check
          %p458 = pneg %p290
        $region46: #{_gated_mlp_impl.1} parent=39 // pred_check_branch
          %460 = sbr.rel (%p458) target = $region48
        $region47: #{_gated_mlp_impl.1} parent=39 // pred_region
          %v461 = vld [vmem:[#allocation2] sm:$0xff]
          %v462 = vld [vmem:[%s4] sm:$0x1]
          %v464 = vperm.slane %v462, 0
          %v466 = vadd.f32 %v461, %v464
          %467 = vst [vmem:[%s270] sm:$0xff] %v466
        $region48: #{_gated_mlp_impl.1} parent=39 // pred_fallthru
          _
        %s468 = sand.u32 %s164, 1
        %s469 = scalar_lea.sflag [#allocation4], %s468
        %s470 = sand.u32 %s164, 1
        %s471 = smul.addr %s470, 8
        %s472 = scalar_lea.vmem [#allocation3], %s471
        // Predicated region
        $region49: #{_gated_mlp_impl.1} parent=39 // pred_check
          %p473 = pneg %p174
        $region50: #{_gated_mlp_impl.1} parent=39 // pred_check_branch
          %475 = sbr.rel (%p473) target = $region52
        $region51: #{_gated_mlp_impl.1} parent=39 // pred_region
          %477 = vsyncadd %s469, 0
          %s478 = smul.addr %s23, 8
          %s479 = scalar_lea.hbm %s5, %s478
          %s481 = sshll.u32 %s472, 4
          %s482 = int_to_ptr.vmem [resolvable:$true] %s481
          %s483 = sshll.u32 %s479, 4
          %s484 = int_to_ptr.hbm [resolvable:$true] %s483
          %486 = dma.vmem_to_hbm [thread:$0]  %s482, 128, %s484, %s469
        $region52: #{_gated_mlp_impl.1} parent=39 // pred_fallthru
          _
      $region40: #{_gated_mlp_impl.1} parent=5 // pred_fallthru
        _
      %p487 = scmp.le.s32.totalorder 2, %s14
      // Predicated region
      $region53: #{_gated_mlp_impl.1} parent=5 // pred_check
        %p488 = pneg %p487
      $region54: #{_gated_mlp_impl.1} parent=5 // pred_check_branch
        %490 = sbr.rel (%p488) target = $region56
      $region55: #{_gated_mlp_impl.1} parent=5 // pred_region
        %s491 = ssub.s32 %s14, 2
        // Predicated region
        $region57: #{_gated_mlp_impl.1} parent=55 // pred_check
          %p492 = pneg %p180
        $region58: #{_gated_mlp_impl.1} parent=55 // pred_check_branch
          %494 = sbr.rel (%p492) target = $region60
        $region59: #{_gated_mlp_impl.1} parent=55 // pred_region
          %s495 = sand.u32 %s165, 1
          %s496 = scalar_lea.sflag [#allocation4], %s495
          %s497 = sand.u32 %s165, 1
          %s498 = smul.addr %s497, 8
          %s499 = scalar_lea.vmem [#allocation3], %s498
          %501 = dma.done %s496, 128
        $region60: #{_gated_mlp_impl.1} parent=55 // pred_fallthru
          _
      $region56: #{_gated_mlp_impl.1} parent=5 // pred_fallthru
        _
    $region6: #{_gated_mlp_impl.1} parent=1 // loop_footer
      %s18 = sadd.s32 1, %s14
    $region7: #{_gated_mlp_impl.1} parent=1 // loop_footer_branch
      %13 = sbr.rel target = $region3
    $region8: #{_gated_mlp_impl.1} parent=1 // loop_exit
      _
    %502 = vsyncpa [#allocation4], 1
    %s503 = scalar_lea.sflag [#allocation4], 1
    %504 = vsyncpa %s503, 1

</llo_original>
